<compile_context>
chip_gen: v7x
topology: tpu7x:2x2x1
jax: 0.10.0
libtpu: 0.0.40
codegen_flags: <defaults>
</compile_context>

<pallas_src>
import functools

import numpy as np
import jax
import jax.numpy as jnp
from jax.experimental import pallas as pl
from jax.experimental.pallas import tpu as pltpu


def _round_up(x, m):
    return (x + m - 1) // m * m


# ------------------------------ Pallas kernel -------------------------------


def _fused_conv_bn_lrelu_pool_kernel(w_ref, a_ref, pool_ref, o_ref, *, q):
    # w_ref:    (Cout, Kp)   bf16  conv weights with BN scale folded in + bias column (K-padded)
    # a_ref:    (Kp, 4*q)    bf16  im2col patches (+ ones bias row), 4 lane-aligned blocks = the
    #                              four 2x2 maxpool window offsets at identical lane positions
    # pool_ref: (q, 128)     bf16  AvgPool2x2 selection/averaging matrix (0 / 0.25), lane-padded
    # o_ref:    (Cout, 128)  f32   lane-dense output (first P columns are real)
    acc = jnp.dot(w_ref[...], a_ref[...], preferred_element_type=jnp.float32)      # (Cout, 4q)

    # MaxPool2d(2,2): the four q-blocks hold the four elements of each 2x2 window at the same
    # lane position -> 3 aligned elementwise maxes.  (BN scale+shift already applied inside acc;
    # LeakyReLU below is monotone, so taking the max first is exact.)
    mx = jnp.maximum(jnp.maximum(acc[:, 0 * q:1 * q], acc[:, 1 * q:2 * q]),
                     jnp.maximum(acc[:, 2 * q:3 * q], acc[:, 3 * q:4 * q]))         # (Cout, q)

    y = jnp.where(mx >= 0.0, mx, 0.01 * mx)       # LeakyReLU(0.01), f32 epilogue

    # AvgPool2d(2,2) + gather of the surviving (floor-mode) columns as one small bf16 matmul
    # into a lane-dense (Cout, 128) result.
    o_ref[...] = jnp.dot(y.astype(jnp.bfloat16), pool_ref[...],
                         preferred_element_type=jnp.float32)                        # (Cout, 128)


# ------------------------------- host wrapper --------------------------------


@functools.partial(jax.jit, static_argnames=("kernel_size", "padding"))
def conv_cnn_forward(x, w, b, gamma, beta, running_mean, running_var,
                     *, kernel_size=7, padding=2, eps=1e-5):
    """ConvCNN.forward with avg=True (eval-mode BatchNorm). x: (N, Cin, H, W) float32."""
    N, Cin, H, W = x.shape
    Cout = w.shape[0]
    KH = KW = kernel_size

    OH = H + 2 * padding - KH + 1
    OW = W + 2 * padding - KW + 1
    MH, MW = OH // 2, OW // 2              # after MaxPool2d(2,2)   (floor)
    AH, AW = MH // 2, MW // 2              # after AvgPool2d(2,2)   (floor)
    K = KH * KW * Cin                      # 196
    Kp = _round_up(K + 1, 16)              # +1 bias row, padded to bf16 sublane tile -> 208
    G = N * MH * MW                        # maxpool output positions (98)
    Q = _round_up(G, 128)                  # lane-aligned block width (128)
    P = N * AH * AW                        # final output positions (18)
    Pq = _round_up(P, 128)                 # lane-dense output width (128)

    # ---- fold BatchNorm(eval) + conv bias into per-channel scale / shift ----
    scale = gamma / jnp.sqrt(running_var + eps)                                   # (Cout,)
    shift = beta + scale * (b - running_mean)                                     # (Cout,)

    # weights -> (Cout, K) with k = (kh, kw, cin); fold scale into W; append bias col; pad; bf16
    wt = jnp.transpose(w, (0, 2, 3, 1)).reshape(Cout, K) * scale[:, None]
    wt = jnp.concatenate([wt, shift[:, None]], axis=1)                            # (Cout, K+1)
    wt = jnp.pad(wt, ((0, 0), (0, Kp - (K + 1)))).astype(jnp.bfloat16)            # (Cout, Kp)

    # ---- im2col (host/XLA), built DIRECTLY in the kernel's (Kp, 4*Q) layout via strided
    #      slices (no intermediate 6-D transpose), all in bf16 so it fuses to one small copy ----
    # column index = (q = di*2+dj maxpool-window offset) * Q + (n * MH*MW + oh' * MW + ow')
    xp = jnp.pad(x, ((0, 0), (0, 0), (padding, padding), (padding, padding)))
    xp = jnp.transpose(xp, (1, 0, 2, 3)).astype(jnp.bfloat16)                     # (Cin, N, Hp, Wp)
    blocks = []
    for di in range(2):
        for dj in range(2):
            cols = [xp[:, :, i + di:i + di + 2 * MH:2, j + dj:j + dj + 2 * MW:2]  # (Cin,N,MH,MW)
                    for i in range(KH) for j in range(KW)]
            blocks.append(jnp.stack(cols, axis=0).reshape(K, G))                  # k=(kh,kw,cin)
    a = jnp.stack(blocks, axis=1)                                                 # (K, 4, G)
    a = jnp.concatenate([a, jnp.ones((1, 4, G), jnp.bfloat16)], axis=0)           # bias row
    a = jnp.pad(a, ((0, Kp - (K + 1)), (0, 0), (0, Q - G))).reshape(Kp, 4 * Q)

    # ---- AvgPool2d(2,2) selection / averaging matrix (Q, Pq), lane-dense, bf16 ----
    pool = np.zeros((Q, Pq), np.float32)
    for n in range(N):
        for ah in range(AH):
            for aw in range(AW):
                col = n * AH * AW + ah * AW + aw
                for da in range(2):
                    for db in range(2):
                        g = n * MH * MW + (2 * ah + da) * MW + (2 * aw + db)
                        pool[g, col] = 0.25
    pool = jnp.asarray(pool, dtype=jnp.bfloat16)

    # ---- single fused Pallas kernel, single grid step ----
    flops = 2 * Cout * Kp * (4 * Q) + 2 * Cout * Q * Pq
    bytes_accessed = 2 * (Cout * Kp + Kp * 4 * Q + Q * Pq) + 4 * Cout * Pq
    out2d = pl.pallas_call(
        functools.partial(_fused_conv_bn_lrelu_pool_kernel, q=Q),
        out_shape=jax.ShapeDtypeStruct((Cout, Pq), jnp.float32),
        grid=(1,),
        in_specs=[
            pl.BlockSpec((Cout, Kp), lambda i: (0, 0)),
            pl.BlockSpec((Kp, 4 * Q), lambda i: (0, 0)),
            pl.BlockSpec((Q, Pq), lambda i: (0, 0)),
        ],
        out_specs=pl.BlockSpec((Cout, Pq), lambda i: (0, 0)),
        compiler_params=pltpu.CompilerParams(dimension_semantics=("arbitrary",)),
        cost_estimate=pl.CostEstimate(flops=flops, transcendentals=0,
                                      bytes_accessed=bytes_accessed),
    )(wt, a, pool)

    # (Cout, Pq) -> drop lane padding -> PyTorch NCHW (N, Cout, AH, AW)
    return jnp.transpose(out2d[:, :P].reshape(Cout, N, AH, AW), (1, 0, 2, 3))


# ----------------------------- pure-JAX reference ----------------------------


def _reference(x, w, b, gamma, beta, rmean, rvar, eps=1e-5):
    y = jax.lax.conv_general_dilated(
        x, w, window_strides=(1, 1), padding=((2, 2), (2, 2)),
        dimension_numbers=("NCHW", "OIHW", "NCHW"))
    y = y + b[None, :, None, None]
    y = (gamma[None, :, None, None] * (y - rmean[None, :, None, None])
         / jnp.sqrt(rvar[None, :, None, None] + eps) + beta[None, :, None, None])
    y = jnp.where(y >= 0, y, 0.01 * y)
    N, C, H, W = y.shape
    y = y[:, :, : (H // 2) * 2, : (W // 2) * 2].reshape(
        N, C, H // 2, 2, W // 2, 2).max(axis=(3, 5))
    N, C, H, W = y.shape
    y = y[:, :, : (H // 2) * 2, : (W // 2) * 2].reshape(
        N, C, H // 2, 2, W // 2, 2).mean(axis=(3, 5))
    return y


# ----------------------------------- main ------------------------------------


if __name__ == "__main__":
    insize, outsize = 4, 8
    N, H, W = 2, 16, 16
    KH = KW = 7

    key = jax.random.PRNGKey(0)
    kx, kw_, kb, kg, kbe, krm, krv = jax.random.split(key, 7)

    x = jax.random.normal(kx, (N, insize, H, W), jnp.float32)
    w = 0.1 * jax.random.normal(kw_, (outsize, insize, KH, KW), jnp.float32)
    b = 0.1 * jax.random.normal(kb, (outsize,), jnp.float32)
    gamma = 1.0 + 0.1 * jax.random.normal(kg, (outsize,), jnp.float32)
    beta = 0.1 * jax.random.normal(kbe, (outsize,), jnp.float32)
    running_mean = 0.1 * jax.random.normal(krm, (outsize,), jnp.float32)
    running_var = 0.5 + jnp.abs(jax.random.normal(krv, (outsize,), jnp.float32))

    out = conv_cnn_forward(x, w, b, gamma, beta, running_mean, running_var,
                           kernel_size=7, padding=2)
    out = jax.block_until_ready(out)

    ref = _reference(x, w, b, gamma, beta, running_mean, running_var)
    assert out.shape == (N, outsize, 3, 3), out.shape
    max_err = float(jnp.max(jnp.abs(out - ref)))
    assert jnp.allclose(out, ref, rtol=2e-2, atol=2e-2), max_err

    print("KERNEL_OK")
</pallas_src>

<mosaic_0001>
module attributes {stable_mosaic.version = 11 : i64} {
  func.func @_fused_conv_bn_lrelu_pool_kernel(%arg0: i32, %arg1: memref<8x208xbf16, #tpu.memory_space<vmem>>, %arg2: memref<208x512xbf16, #tpu.memory_space<vmem>>, %arg3: memref<128x128xbf16, #tpu.memory_space<vmem>>, %arg4: memref<8x128xf32, #tpu.memory_space<vmem>>) attributes {dimension_semantics = [#tpu.dimension_semantics<arbitrary>], iteration_bounds = array<i64: 1>, scalar_prefetch = 0 : i64, scratch_operands = 0 : i64, tpu.core_type = #tpu.core_type<tc>, window_params = [{pipeline_mode = #tpu.pipeline_mode<synchronous>, transform_indices = @transform_0, window_bounds = array<i64: 8, 208>}, {pipeline_mode = #tpu.pipeline_mode<synchronous>, transform_indices = @transform_1, window_bounds = array<i64: 208, 512>}, {pipeline_mode = #tpu.pipeline_mode<synchronous>, transform_indices = @transform_2, window_bounds = array<i64: 128, 128>}, {pipeline_mode = #tpu.pipeline_mode<synchronous>, transform_indices = @transform_3, window_bounds = array<i64: 8, 128>}]} {
    %c0 = arith.constant 0 : index
    %c0_0 = arith.constant 0 : index
    %0 = vector.load %arg1[%c0, %c0_0] : memref<8x208xbf16, #tpu.memory_space<vmem>>, vector<8x208xbf16>
    %c0_1 = arith.constant 0 : index
    %c0_2 = arith.constant 0 : index
    %1 = vector.load %arg2[%c0_1, %c0_2] : memref<208x512xbf16, #tpu.memory_space<vmem>>, vector<208x512xbf16>
    %cst = arith.constant dense<0.000000e+00> : vector<8x512xf32>
    %2 = tpu.matmul %0, %1, %cst {dimension_numbers = #tpu.dot_dimension_numbers<[1], [0], [0], [1], [0, 0, 1, 1], [], []>} : vector<8x208xbf16>, vector<208x512xbf16>, vector<8x512xf32> -> vector<8x512xf32>
    %3 = vector.extract_strided_slice %2 {offsets = [0, 0], sizes = [8, 128], strides = [1, 1]} : vector<8x512xf32> to vector<8x128xf32>
    %4 = vector.extract_strided_slice %2 {offsets = [0, 128], sizes = [8, 128], strides = [1, 1]} : vector<8x512xf32> to vector<8x128xf32>
    %5 = arith.maximumf %3, %4 : vector<8x128xf32>
    %6 = vector.extract_strided_slice %2 {offsets = [0, 256], sizes = [8, 128], strides = [1, 1]} : vector<8x512xf32> to vector<8x128xf32>
    %7 = vector.extract_strided_slice %2 {offsets = [0, 384], sizes = [8, 128], strides = [1, 1]} : vector<8x512xf32> to vector<8x128xf32>
    %8 = arith.maximumf %6, %7 : vector<8x128xf32>
    %9 = arith.maximumf %5, %8 : vector<8x128xf32>
    %cst_3 = arith.constant 0.000000e+00 : f32
    %10 = vector.broadcast %cst_3 : f32 to vector<8x128xf32>
    %11 = arith.cmpf oge, %9, %10 : vector<8x128xf32>
    %cst_4 = arith.constant 0.00999999977 : f32
    %12 = vector.broadcast %cst_4 : f32 to vector<8x128xf32>
    %13 = arith.mulf %12, %9 : vector<8x128xf32>
    %14 = arith.select %11, %9, %13 : vector<8x128xi1>, vector<8x128xf32>
    %15 = arith.truncf %14 : vector<8x128xf32> to vector<8x128xbf16>
    %c0_5 = arith.constant 0 : index
    %c0_6 = arith.constant 0 : index
    %16 = vector.load %arg3[%c0_5, %c0_6] : memref<128x128xbf16, #tpu.memory_space<vmem>>, vector<128x128xbf16>
    %cst_7 = arith.constant dense<0.000000e+00> : vector<8x128xf32>
    %17 = tpu.matmul %15, %16, %cst_7 {dimension_numbers = #tpu.dot_dimension_numbers<[1], [0], [0], [1], [0, 0, 1, 1], [], []>} : vector<8x128xbf16>, vector<128x128xbf16>, vector<8x128xf32> -> vector<8x128xf32>
    %c0_8 = arith.constant 0 : index
    %c0_9 = arith.constant 0 : index
    %18 = vector.load %arg4[%c0_8, %c0_9] : memref<8x128xf32, #tpu.memory_space<vmem>>, vector<8x128xf32>
    tpu.vector_store %arg4[%c0_8, %c0_9], %17 {strides = array<i32>} : memref<8x128xf32, #tpu.memory_space<vmem>>, vector<8x128xf32>,
    return
  }
  func.func @transform_0(%arg0: i32) -> (i32, i32) {
    %c0_i32 = arith.constant 0 : i32
    %c0_i32_0 = arith.constant 0 : i32
    %c0_i32_1 = arith.constant 0 : i32
    return %c0_i32, %c0_i32_0 : i32, i32
  }
  func.func @transform_1(%arg0: i32) -> (i32, i32) {
    %c0_i32 = arith.constant 0 : i32
    %c0_i32_0 = arith.constant 0 : i32
    %c0_i32_1 = arith.constant 0 : i32
    return %c0_i32, %c0_i32_0 : i32, i32
  }
  func.func @transform_2(%arg0: i32) -> (i32, i32) {
    %c0_i32 = arith.constant 0 : i32
    %c0_i32_0 = arith.constant 0 : i32
    %c0_i32_1 = arith.constant 0 : i32
    return %c0_i32, %c0_i32_0 : i32, i32
  }
  func.func @transform_3(%arg0: i32) -> (i32, i32) {
    %c0_i32 = arith.constant 0 : i32
    %c0_i32_0 = arith.constant 0 : i32
    %c0_i32_1 = arith.constant 0 : i32
    return %c0_i32, %c0_i32_0 : i32, i32
  }
}

</mosaic_0001>

<llo_original>
// kernel: conv_cnn_forward.1
$region0: #{conv_cnn_forward.1}
  #allocation0 [shape = 'u32[]', space=smem, size = 0x4, offset = 0x4, fixed_abs, tag = 'smem constant byte address 0x4 - core index']
  #allocation1 [shape = 'u32[144,128]{1,0:T(1,128)}', space=vmem, size = 0x12000, scoped, tag = 'internal scratch']
  %s0 = inlined_call_operand.vmem [shape: bf16[8,208], index: 0, kind: input, shape index: {}]
  %s1 = inlined_call_operand.vmem [shape: bf16[208,512], index: 1, kind: input, shape index: {}]
  %s2 = inlined_call_operand.vmem [shape: bf16[128,128], index: 2, kind: input, shape index: {}]
  %s3 = inlined_call_operand.vmem [shape: f32[8,128], index: 3, kind: output, shape index: {}]
  %s4 = sld [smem:[#allocation0]]
  $region22: #{conv_cnn_forward.1} parent=0
    _
  %s6 = ssub.s32 1, %s4
  %s7 = scalar_select 0, %s6, %s4
  // Predicated region
  $region2: #{conv_cnn_forward.1} parent=0 // pred_check
    _
  $region3: #{conv_cnn_forward.1} parent=0 // pred_check_branch
    %9 = sbr.rel (0) target = $region5
  $region4: #{conv_cnn_forward.1} parent=0 // pred_region
    _
  $region5: #{conv_cnn_forward.1} parent=0 // pred_fallthru
    _
  // Predicated region
  $region6: #{conv_cnn_forward.1} parent=0 // pred_check
    _
  $region7: #{conv_cnn_forward.1} parent=0 // pred_check_branch
    %11 = sbr.rel (0) target = $region9
  $region8: #{conv_cnn_forward.1} parent=0 // pred_region
    _
  $region9: #{conv_cnn_forward.1} parent=0 // pred_fallthru
    _
  // Predicated region
  $region10: #{conv_cnn_forward.1} parent=0 // pred_check
    _
  $region11: #{conv_cnn_forward.1} parent=0 // pred_check_branch
    %13 = sbr.rel (0) target = $region13
  $region12: #{conv_cnn_forward.1} parent=0 // pred_region
    _
  $region13: #{conv_cnn_forward.1} parent=0 // pred_fallthru
    _
  %v15 = vld [vmem:[%s0] sm:$0xff]
  %v16 = vld [vmem:[%s1] sm:$0xff]
  %v17 = vld [vmem:[%s1 + $0x8] sm:$0xff]
  %v18 = vld [vmem:[%s1 + $0x10] sm:$0xff]
  %v19 = vld [vmem:[%s1 + $0x18] sm:$0xff]
  %v20 = vld [vmem:[%s1 + $0x20] sm:$0xff]
  %v21 = vld [vmem:[%s1 + $0x28] sm:$0xff]
  %v22 = vld [vmem:[%s1 + $0x30] sm:$0xff]
  %v23 = vld [vmem:[%s1 + $0x38] sm:$0xff]
  %v24 = vld [vmem:[%s1 + $0x40] sm:$0xff]
  %v25 = vld [vmem:[%s1 + $0x48] sm:$0xff]
  %v26 = vld [vmem:[%s1 + $0x50] sm:$0xff]
  %v27 = vld [vmem:[%s1 + $0x58] sm:$0xff]
  %v28 = vld [vmem:[%s1 + $0x60] sm:$0xff]
  %v29 = vld [vmem:[%s1 + $0x68] sm:$0xff]
  %v30 = vld [vmem:[%s1 + $0x70] sm:$0xff]
  %v31 = vld [vmem:[%s1 + $0x78] sm:$0xff]
  %v32 = vld [vmem:[%s1 + $0x80] sm:$0xff]
  %v33 = vld [vmem:[%s1 + $0x88] sm:$0xff]
  %v34 = vld [vmem:[%s1 + $0x90] sm:$0xff]
  %v35 = vld [vmem:[%s1 + $0x98] sm:$0xff]
  %v36 = vld [vmem:[%s1 + $0xa0] sm:$0xff]
  %v37 = vld [vmem:[%s1 + $0xa8] sm:$0xff]
  %v38 = vld [vmem:[%s1 + $0xb0] sm:$0xff]
  %v39 = vld [vmem:[%s1 + $0xb8] sm:$0xff]
  %v40 = vld [vmem:[%s1 + $0xc0] sm:$0xff]
  %v41 = vld [vmem:[%s1 + $0xc8] sm:$0xff]
  %v42 = vld [vmem:[%s1 + $0xd0] sm:$0xff]
  %v43 = vld [vmem:[%s1 + $0xd8] sm:$0xff]
  %v44 = vld [vmem:[%s1 + $0xe0] sm:$0xff]
  %v45 = vld [vmem:[%s1 + $0xe8] sm:$0xff]
  %v46 = vld [vmem:[%s1 + $0xf0] sm:$0xff]
  %v47 = vld [vmem:[%s1 + $0xf8] sm:$0xff]
  %v48 = vld [vmem:[%s1 + $0x100] sm:$0xff]
  %v49 = vld [vmem:[%s1 + $0x108] sm:$0xff]
  %v50 = vld [vmem:[%s1 + $0x110] sm:$0xff]
  %v51 = vld [vmem:[%s1 + $0x118] sm:$0xff]
  %v52 = vld [vmem:[%s1 + $0x120] sm:$0xff]
  %v53 = vld [vmem:[%s1 + $0x128] sm:$0xff]
  %v54 = vld [vmem:[%s1 + $0x130] sm:$0xff]
  %v55 = vld [vmem:[%s1 + $0x138] sm:$0xff]
  %v56 = vld [vmem:[%s1 + $0x140] sm:$0xff]
  %v57 = vld [vmem:[%s1 + $0x148] sm:$0xff]
  %v58 = vld [vmem:[%s1 + $0x150] sm:$0xff]
  %v59 = vld [vmem:[%s1 + $0x158] sm:$0xff]
  %v60 = vld [vmem:[%s1 + $0x160] sm:$0xff]
  %v61 = vld [vmem:[%s1 + $0x168] sm:$0xff]
  %v62 = vld [vmem:[%s1 + $0x170] sm:$0xff]
  %v63 = vld [vmem:[%s1 + $0x178] sm:$0xff]
  %v64 = vld [vmem:[%s1 + $0x180] sm:$0xff]
  %v65 = vld [vmem:[%s1 + $0x188] sm:$0xff]
  %v66 = vld [vmem:[%s1 + $0x190] sm:$0xff]
  %v67 = vld [vmem:[%s1 + $0x198] sm:$0xff]
  %v69 = vunpack.c.l.b16 %v15
  %v70 = vunpack.c.h.b16 %v15
  %v71 = vpack.c.b16 %v69, %v69
  %v72 = vpack.c.b16 %v70, %v70
  %v126 = vunpack.c.l.b16 %v16
  %v127 = vunpack.c.h.b16 %v16
  %v128 = vunpack.c.l.b16 %v17
  %v129 = vunpack.c.h.b16 %v17
  %v130 = vunpack.c.l.b16 %v18
  %v131 = vunpack.c.h.b16 %v18
  %v132 = vunpack.c.l.b16 %v19
  %v133 = vunpack.c.h.b16 %v19
  %v134 = vunpack.c.l.b16 %v20
  %v135 = vunpack.c.h.b16 %v20
  %v136 = vunpack.c.l.b16 %v21
  %v137 = vunpack.c.h.b16 %v21
  %v138 = vunpack.c.l.b16 %v22
  %v139 = vunpack.c.h.b16 %v22
  %v140 = vunpack.c.l.b16 %v23
  %v141 = vunpack.c.h.b16 %v23
  %v142 = vunpack.c.l.b16 %v24
  %v143 = vunpack.c.h.b16 %v24
  %v144 = vunpack.c.l.b16 %v25
  %v145 = vunpack.c.h.b16 %v25
  %v146 = vunpack.c.l.b16 %v26
  %v147 = vunpack.c.h.b16 %v26
  %v148 = vunpack.c.l.b16 %v27
  %v149 = vunpack.c.h.b16 %v27
  %v150 = vunpack.c.l.b16 %v28
  %v151 = vunpack.c.h.b16 %v28
  %v152 = vunpack.c.l.b16 %v29
  %v153 = vunpack.c.h.b16 %v29
  %v154 = vunpack.c.l.b16 %v30
  %v155 = vunpack.c.h.b16 %v30
  %v156 = vunpack.c.l.b16 %v31
  %v157 = vunpack.c.h.b16 %v31
  %v158 = vunpack.c.l.b16 %v32
  %v159 = vunpack.c.h.b16 %v32
  %v160 = vunpack.c.l.b16 %v33
  %v161 = vunpack.c.h.b16 %v33
  %v162 = vunpack.c.l.b16 %v34
  %v163 = vunpack.c.h.b16 %v34
  %v164 = vunpack.c.l.b16 %v35
  %v165 = vunpack.c.h.b16 %v35
  %v166 = vunpack.c.l.b16 %v36
  %v167 = vunpack.c.h.b16 %v36
  %v168 = vunpack.c.l.b16 %v37
  %v169 = vunpack.c.h.b16 %v37
  %v170 = vunpack.c.l.b16 %v38
  %v171 = vunpack.c.h.b16 %v38
  %v172 = vunpack.c.l.b16 %v39
  %v173 = vunpack.c.h.b16 %v39
  %v174 = vunpack.c.l.b16 %v40
  %v175 = vunpack.c.h.b16 %v40
  %v176 = vunpack.c.l.b16 %v41
  %v177 = vunpack.c.h.b16 %v41
  %v178 = vunpack.c.l.b16 %v42
  %v179 = vunpack.c.h.b16 %v42
  %v180 = vunpack.c.l.b16 %v43
  %v181 = vunpack.c.h.b16 %v43
  %v182 = vunpack.c.l.b16 %v44
  %v183 = vunpack.c.h.b16 %v44
  %v184 = vunpack.c.l.b16 %v45
  %v185 = vunpack.c.h.b16 %v45
  %v186 = vunpack.c.l.b16 %v46
  %v187 = vunpack.c.h.b16 %v46
  %v188 = vunpack.c.l.b16 %v47
  %v189 = vunpack.c.h.b16 %v47
  %v190 = vunpack.c.l.b16 %v48
  %v191 = vunpack.c.h.b16 %v48
  %v192 = vunpack.c.l.b16 %v49
  %v193 = vunpack.c.h.b16 %v49
  %v194 = vunpack.c.l.b16 %v50
  %v195 = vunpack.c.h.b16 %v50
  %v196 = vunpack.c.l.b16 %v51
  %v197 = vunpack.c.h.b16 %v51
  %v198 = vunpack.c.l.b16 %v52
  %v199 = vunpack.c.h.b16 %v52
  %v200 = vunpack.c.l.b16 %v53
  %v201 = vunpack.c.h.b16 %v53
  %v202 = vunpack.c.l.b16 %v54
  %v203 = vunpack.c.h.b16 %v54
  %v204 = vunpack.c.l.b16 %v55
  %v205 = vunpack.c.h.b16 %v55
  %v206 = vunpack.c.l.b16 %v56
  %v207 = vunpack.c.h.b16 %v56
  %v208 = vunpack.c.l.b16 %v57
  %v209 = vunpack.c.h.b16 %v57
  %v210 = vunpack.c.l.b16 %v58
  %v211 = vunpack.c.h.b16 %v58
  %v212 = vunpack.c.l.b16 %v59
  %v213 = vunpack.c.h.b16 %v59
  %v214 = vunpack.c.l.b16 %v60
  %v215 = vunpack.c.h.b16 %v60
  %v216 = vunpack.c.l.b16 %v61
  %v217 = vunpack.c.h.b16 %v61
  %v218 = vunpack.c.l.b16 %v62
  %v219 = vunpack.c.h.b16 %v62
  %v220 = vunpack.c.l.b16 %v63
  %v221 = vunpack.c.h.b16 %v63
  %v222 = vunpack.c.l.b16 %v64
  %v223 = vunpack.c.h.b16 %v64
  %v224 = vunpack.c.l.b16 %v65
  %v225 = vunpack.c.h.b16 %v65
  %v226 = vunpack.c.l.b16 %v66
  %v227 = vunpack.c.h.b16 %v66
  %v228 = vunpack.c.l.b16 %v67
  %v229 = vunpack.c.h.b16 %v67
  %v230 = vpack.c.b16 %v130, %v126
  %v231 = vpack.c.b16 %v131, %v127
  %v232 = vpack.c.b16 %v132, %v128
  %v233 = vpack.c.b16 %v133, %v129
  %v234 = vpack.c.b16 %v138, %v134
  %v235 = vpack.c.b16 %v139, %v135
  %v236 = vpack.c.b16 %v140, %v136
  %v237 = vpack.c.b16 %v141, %v137
  %v238 = vpack.c.b16 %v146, %v142
  %v239 = vpack.c.b16 %v147, %v143
  %v240 = vpack.c.b16 %v148, %v144
  %v241 = vpack.c.b16 %v149, %v145
  %v242 = vpack.c.b16 %v154, %v150
  %v243 = vpack.c.b16 %v155, %v151
  %v244 = vpack.c.b16 %v156, %v152
  %v245 = vpack.c.b16 %v157, %v153
  %v246 = vpack.c.b16 %v162, %v158
  %v247 = vpack.c.b16 %v163, %v159
  %v248 = vpack.c.b16 %v164, %v160
  %v249 = vpack.c.b16 %v165, %v161
  %v250 = vpack.c.b16 %v170, %v166
  %v251 = vpack.c.b16 %v171, %v167
  %v252 = vpack.c.b16 %v172, %v168
  %v253 = vpack.c.b16 %v173, %v169
  %v254 = vpack.c.b16 %v178, %v174
  %v255 = vpack.c.b16 %v179, %v175
  %v256 = vpack.c.b16 %v180, %v176
  %v257 = vpack.c.b16 %v181, %v177
  %v258 = vpack.c.b16 %v186, %v182
  %v259 = vpack.c.b16 %v187, %v183
  %v260 = vpack.c.b16 %v188, %v184
  %v261 = vpack.c.b16 %v189, %v185
  %v262 = vpack.c.b16 %v194, %v190
  %v263 = vpack.c.b16 %v195, %v191
  %v264 = vpack.c.b16 %v196, %v192
  %v265 = vpack.c.b16 %v197, %v193
  %v266 = vpack.c.b16 %v202, %v198
  %v267 = vpack.c.b16 %v203, %v199
  %v268 = vpack.c.b16 %v204, %v200
  %v269 = vpack.c.b16 %v205, %v201
  %v270 = vpack.c.b16 %v210, %v206
  %v271 = vpack.c.b16 %v211, %v207
  %v272 = vpack.c.b16 %v212, %v208
  %v273 = vpack.c.b16 %v213, %v209
  %v274 = vpack.c.b16 %v218, %v214
  %v275 = vpack.c.b16 %v219, %v215
  %v276 = vpack.c.b16 %v220, %v216
  %v277 = vpack.c.b16 %v221, %v217
  %v278 = vpack.c.b16 %v226, %v222
  %v279 = vpack.c.b16 %v227, %v223
  %v280 = vpack.c.b16 %v228, %v224
  %v281 = vpack.c.b16 %v229, %v225
  %vm334 = vcmask 654336
  %v336 = vsel %vm334, %v72, 0
  %338 = vmatprep.subr.bf16.mxu0 %v231
  %339 = vmatpush1.bf16.msra.mxu0 %v230
  %340 = vmatprep.subr.bf16.mxu0 %v235
  %341 = vmatpush1.bf16.msra.mxu0 %v234
  %342 = vmatprep.subr.bf16.mxu0 %v239
  %343 = vmatpush1.bf16.msra.mxu0 %v238
  %344 = vmatprep.subr.bf16.mxu0 %v243
  %345 = vmatpush1.bf16.msra.mxu0 %v242
  %346 = vmatprep.subr.bf16.mxu0 %v247
  %347 = vmatpush1.bf16.msra.mxu0 %v246
  %348 = vmatprep.subr.bf16.mxu0 %v251
  %349 = vmatpush1.bf16.msra.mxu0 %v250
  %350 = vmatprep.subr.bf16.mxu0 %v255
  %351 = vmatpush1.bf16.msra.mxu0 %v254
  %352 = vmatprep.subr.bf16.mxu0 %v259
  %353 = vmatpush1.bf16.msra.mxu0 %v258
  %354 = vmatprep.subr.bf16.mxu0 %v263
  %355 = vmatpush1.bf16.msra.mxu0 %v262
  %356 = vmatprep.subr.bf16.mxu0 %v267
  %357 = vmatpush1.bf16.msra.mxu0 %v266
  %358 = vmatprep.subr.bf16.mxu0 %v271
  %359 = vmatpush1.bf16.msra.mxu0 %v270
  %360 = vmatprep.subr.bf16.mxu0 %v275
  %361 = vmatpush1.bf16.msra.mxu0 %v274
  %362 = vmatprep.subr.bf16.mxu0 %v279
  %363 = vmatpush1.bf16.msra.mxu0 %v278
  %364 = vmatprep.subr.bf16.mxu0 0
  %365 = vmatpush1.bf16.msra.mxu0 0
  %366 = vmatprep.subr.bf16.mxu0 0
  %367 = vmatpush1.bf16.msra.mxu0 0
  %368 = vmatprep.subr.bf16.mxu0 0
  %369 = vmatpush1.bf16.msra.mxu0 0
  %370 = vmatprep.mubr.bf16.mxu0 %v336
  %371 = vmatmul.mubr.bf16.gmra.mrb[0].mxu0 %v71
  %v372 = vpop.f32.mrb[0].mxu0
  %v373 = vadd.f32 0.0, %v372
  %v374 = vpop.f32.mrb[0].mxu0
  %v375 = vadd.f32 0.0, %v374
  %v376 = vpop.f32.mrb[0].mxu0
  %v377 = vpop.f32.mrb[0].mxu0
  %378 = vdwg.mxu0
  %379 = vmatprep.subr.bf16.mxu0 %v233
  %380 = vmatpush1.bf16.msra.mxu0 %v232
  %381 = vmatprep.subr.bf16.mxu0 %v237
  %382 = vmatpush1.bf16.msra.mxu0 %v236
  %383 = vmatprep.subr.bf16.mxu0 %v241
  %384 = vmatpush1.bf16.msra.mxu0 %v240
  %385 = vmatprep.subr.bf16.mxu0 %v245
  %386 = vmatpush1.bf16.msra.mxu0 %v244
  %387 = vmatprep.subr.bf16.mxu0 %v249
  %388 = vmatpush1.bf16.msra.mxu0 %v248
  %389 = vmatprep.subr.bf16.mxu0 %v253
  %390 = vmatpush1.bf16.msra.mxu0 %v252
  %391 = vmatprep.subr.bf16.mxu0 %v257
  %392 = vmatpush1.bf16.msra.mxu0 %v256
  %393 = vmatprep.subr.bf16.mxu0 %v261
  %394 = vmatpush1.bf16.msra.mxu0 %v260
  %395 = vmatprep.subr.bf16.mxu0 %v265
  %396 = vmatpush1.bf16.msra.mxu0 %v264
  %397 = vmatprep.subr.bf16.mxu0 %v269
  %398 = vmatpush1.bf16.msra.mxu0 %v268
  %399 = vmatprep.subr.bf16.mxu0 %v273
  %400 = vmatpush1.bf16.msra.mxu0 %v272
  %401 = vmatprep.subr.bf16.mxu0 %v277
  %402 = vmatpush1.bf16.msra.mxu0 %v276
  %403 = vmatprep.subr.bf16.mxu0 %v281
  %404 = vmatpush1.bf16.msra.mxu0 %v280
  %405 = vmatprep.subr.bf16.mxu0 0
  %406 = vmatpush1.bf16.msra.mxu0 0
  %407 = vmatprep.subr.bf16.mxu0 0
  %408 = vmatpush1.bf16.msra.mxu0 0
  %409 = vmatprep.subr.bf16.mxu0 0
  %410 = vmatpush1.bf16.msra.mxu0 0
  %411 = vmatprep.mubr.bf16.mxu0 %v336
  %412 = vmatmul.mubr.bf16.gmra.mrb[0].mxu0 %v71
  %v413 = vpop.f32.mrb[0].mxu0
  %v414 = vadd.f32 0.0, %v413
  %v415 = vpop.f32.mrb[0].mxu0
  %v416 = vadd.f32 0.0, %v415
  %v417 = vpop.f32.mrb[0].mxu0
  %v418 = vpop.f32.mrb[0].mxu0
  %419 = vdwg.mxu0
  %v420 = vmax.f32 %v373, %v375
  %v421 = vmax.f32 %v414, %v416
  %v422 = vmax.f32 %v420, %v421
  %vm423 = vcmp.ge.f32.partialorder %v422, 0.0
  %v424 = vmul.f32 %v422, 0.01
  %v425 = vsel %vm423, %v422, %v424
  %v426 = vpack.c.bf16 %v425, %v425
  %v427 = vld [vmem:[%s2] sm:$0xf]
  %v428 = vld [vmem:[%s2 + $0x4] sm:$0xf]
  %v429 = vld [vmem:[%s2 + $0x8] sm:$0xf]
  %v430 = vld [vmem:[%s2 + $0xc] sm:$0xf]
  %v431 = vld [vmem:[%s2 + $0x10] sm:$0xf]
  %v432 = vld [vmem:[%s2 + $0x14] sm:$0xf]
  %v433 = vld [vmem:[%s2 + $0x18] sm:$0xf]
  %v434 = vld [vmem:[%s2 + $0x1c] sm:$0xf]
  %v435 = vld [vmem:[%s2 + $0x20] sm:$0xf]
  %v436 = vld [vmem:[%s2 + $0x24] sm:$0xf]
  %v437 = vld [vmem:[%s2 + $0x28] sm:$0xf]
  %v438 = vld [vmem:[%s2 + $0x2c] sm:$0xf]
  %v439 = vld [vmem:[%s2 + $0x30] sm:$0xf]
  %v440 = vld [vmem:[%s2 + $0x34] sm:$0xf]
  %v441 = vld [vmem:[%s2 + $0x38] sm:$0xf]
  %v442 = vld [vmem:[%s2 + $0x3c] sm:$0xf]
  %v459 = vunpack.c.l.b16 %v427
  %v460 = vunpack.c.l.b16 %v428
  %v461 = vunpack.c.l.b16 %v429
  %v462 = vunpack.c.l.b16 %v430
  %v463 = vunpack.c.l.b16 %v431
  %v464 = vunpack.c.l.b16 %v432
  %v465 = vunpack.c.l.b16 %v433
  %v466 = vunpack.c.l.b16 %v434
  %v467 = vunpack.c.l.b16 %v435
  %v468 = vunpack.c.l.b16 %v436
  %v469 = vunpack.c.l.b16 %v437
  %v470 = vunpack.c.l.b16 %v438
  %v471 = vunpack.c.l.b16 %v439
  %v472 = vunpack.c.l.b16 %v440
  %v473 = vunpack.c.l.b16 %v441
  %v474 = vunpack.c.l.b16 %v442
  %v475 = vpack.c.b16 %v460, %v459
  %v476 = vpack.c.b16 %v462, %v461
  %v477 = vpack.c.b16 %v464, %v463
  %v478 = vpack.c.b16 %v466, %v465
  %v479 = vpack.c.b16 %v468, %v467
  %v480 = vpack.c.b16 %v470, %v469
  %v481 = vpack.c.b16 %v472, %v471
  %v482 = vpack.c.b16 %v474, %v473
  %491 = vmatprep.subr.bf16.mxu0 0
  %492 = vmatpush1.bf16.msra.mxu0 %v475
  %493 = vmatprep.subr.bf16.mxu0 0
  %494 = vmatpush1.bf16.msra.mxu0 %v476
  %495 = vmatprep.subr.bf16.mxu0 0
  %496 = vmatpush1.bf16.msra.mxu0 %v477
  %497 = vmatprep.subr.bf16.mxu0 0
  %498 = vmatpush1.bf16.msra.mxu0 %v478
  %499 = vmatprep.subr.bf16.mxu0 0
  %500 = vmatpush1.bf16.msra.mxu0 %v479
  %501 = vmatprep.subr.bf16.mxu0 0
  %502 = vmatpush1.bf16.msra.mxu0 %v480
  %503 = vmatprep.subr.bf16.mxu0 0
  %504 = vmatpush1.bf16.msra.mxu0 %v481
  %505 = vmatprep.subr.bf16.mxu0 0
  %506 = vmatpush1.bf16.msra.mxu0 %v482
  %507 = vmatprep.subr.bf16.mxu0 0
  %508 = vmatpush1.bf16.msra.mxu0 0
  %509 = vmatprep.subr.bf16.mxu0 0
  %510 = vmatpush1.bf16.msra.mxu0 0
  %511 = vmatprep.subr.bf16.mxu0 0
  %512 = vmatpush1.bf16.msra.mxu0 0
  %513 = vmatprep.subr.bf16.mxu0 0
  %514 = vmatpush1.bf16.msra.mxu0 0
  %515 = vmatprep.subr.bf16.mxu0 0
  %516 = vmatpush1.bf16.msra.mxu0 0
  %517 = vmatprep.subr.bf16.mxu0 0
  %518 = vmatpush1.bf16.msra.mxu0 0
  %519 = vmatprep.subr.bf16.mxu0 0
  %520 = vmatpush1.bf16.msra.mxu0 0
  %521 = vmatprep.subr.bf16.mxu0 0
  %522 = vmatpush1.bf16.msra.mxu0 0
  %523 = vmatprep.mubr.bf16.mxu0 0
  %524 = vmatmul.mubr.bf16.gmra.mrb[0].mxu0 %v426
  %v525 = vpop.f32.mrb[0].mxu0
  %v526 = vadd.f32 0.0, %v525
  %v527 = vpop.f32.mrb[0].mxu0
  %v528 = vpop.f32.mrb[0].mxu0
  %v529 = vpop.f32.mrb[0].mxu0
  %530 = vdwg.mxu0
  %531 = vst [vmem:[%s3] sm:$0xff] %v526
  // Predicated region
  $region14: #{conv_cnn_forward.1} parent=0 // pred_check
    _
  $region15: #{conv_cnn_forward.1} parent=0 // pred_check_branch
    %533 = sbr.rel (0) target = $region17
  $region16: #{conv_cnn_forward.1} parent=0 // pred_region
    _
  $region17: #{conv_cnn_forward.1} parent=0 // pred_fallthru
    _
  // Predicated region
  $region18: #{conv_cnn_forward.1} parent=0 // pred_check
    _
  $region19: #{conv_cnn_forward.1} parent=0 // pred_check_branch
    %535 = sbr.rel (0) target = $region21
  $region20: #{conv_cnn_forward.1} parent=0 // pred_region
    _
  $region21: #{conv_cnn_forward.1} parent=0 // pred_fallthru
    _

</llo_original>
